<compile_context>
chip_gen: v7x
topology: tpu7x:2x2x1
jax: 0.10.0
libtpu: 0.0.40
codegen_flags: <defaults>
</compile_context>

<pallas_src>
import jax
import jax.numpy as jnp
from jax.experimental import pallas as pl
from jax.experimental.pallas import tpu as pltpu

NEG_SLOPE = 0.2


def _ldisc_kernel(x_ref, w1_ref, b1_ref, w2_ref, b2_ref, w3t_ref, b3t_ref, o_ref):
    """One batch tile: Linear -> LeakyReLU -> Linear -> LeakyReLU -> Linear.

    x_ref: (TB, nROI) f32.  Weights/biases are VMEM-resident (constant
    index_maps).  o_ref: (2, TB) f32 -- lane-dense, transposed output.
    """
    x = x_ref[...]

    # Layer 1: Linear + LeakyReLU(0.2)
    h1 = jnp.dot(x, w1_ref[...], preferred_element_type=jnp.float32) + b1_ref[...]
    h1 = jnp.maximum(h1, NEG_SLOPE * h1)

    # Layer 2: Linear + LeakyReLU(0.2)
    h2 = jnp.dot(h1, w2_ref[...], preferred_element_type=jnp.float32) + b2_ref[...]
    h2 = jnp.maximum(h2, NEG_SLOPE * h2)

    # Layer 3 computed transposed: (2, h2) contracted with (TB, h2) -> (2, TB),
    # so the store path is lane-dense instead of width-2 masked stores.
    out_t = jax.lax.dot_general(
        w3t_ref[...], h2,
        dimension_numbers=(((1,), (1,)), ((), ())),
        preferred_element_type=jnp.float32) + b3t_ref[...]
    o_ref[...] = out_t


def _jnp_forward(x, params):
    """Plain-XLA forward (reference + small-batch fast path), all f32."""
    def lrelu(v):
        return jnp.maximum(v, NEG_SLOPE * v)

    h1 = lrelu(x @ params["w1"] + params["b1"])
    h2 = lrelu(h1 @ params["w2"] + params["b2"])
    return h2 @ params["w3"] + params["b3"]


def _round_up(v, m):
    return -(-v // m) * m


def ldiscriminator_forward(x, params, *, tile_rows=8192, min_pallas_rows=512):
    """x: (B, nROI) float32.  params: w1,b1,w2,b2,w3,b3 (w as (in,out), b as (1,out))."""
    B, nROI = x.shape
    d1 = params["w1"].shape[1]
    d2 = params["w2"].shape[1]

    # Small-batch fast path: pallas_call launch + tiling overhead dominates
    # below a few hundred/thousand rows; plain XLA is faster there.
    if B < min_pallas_rows:
        return _jnp_forward(x, params)

    # Batch-tile selection:
    #   * B <= 128: one full-extent block (always layout-legal).
    #   * else: TB is a multiple of 128 (keeps the lane-dense (2, TB) output
    #     block legal with a cdiv grid), capped so the grid has ~>=4 steps
    #     (keeps both v7x TensorCores busy) and by tile_rows (VMEM budget;
    #     sweep 4096-16384).
    tile_rows = max(128, _round_up(tile_rows, 128))
    if B <= 128:
        TB = B
    else:
        TB = min(tile_rows, max(128, _round_up(pl.cdiv(B, 4), 128)))
    grid = (pl.cdiv(B, TB),)

    x_f32 = x.astype(jnp.float32)
    w1 = params["w1"].astype(jnp.float32)       # (nROI, d1)
    w2 = params["w2"].astype(jnp.float32)       # (d1, d2)
    w3t = params["w3"].T.astype(jnp.float32)    # (2, d2)
    b1 = params["b1"].astype(jnp.float32)       # (1, d1)
    b2 = params["b2"].astype(jnp.float32)       # (1, d2)
    b3t = params["b3"].T.astype(jnp.float32)    # (2, 1)

    flops = 2 * B * (nROI * d1 + d1 * d2 + d2 * 2)
    bytes_accessed = 4 * (x_f32.size + 2 * B + w1.size + w2.size + w3t.size
                          + b1.size + b2.size + b3t.size)

    # Large tiles (f32 x block is lane-padded to 128 lanes in VMEM) need more
    # scoped VMEM than the v5e default (~16 MiB); 48 MiB fits all generations.
    vmem_limit = 48 * 1024 * 1024 if TB >= 2048 else None

    out_t = pl.pallas_call(
        _ldisc_kernel,
        out_shape=jax.ShapeDtypeStruct((2, B), jnp.float32),
        grid=grid,
        in_specs=[
            pl.BlockSpec((TB, nROI), lambda i: (i, 0)),   # x tiles, pipelined
            pl.BlockSpec((nROI, d1), lambda i: (0, 0)),   # weights/biases resident
            pl.BlockSpec((1, d1), lambda i: (0, 0)),
            pl.BlockSpec((d1, d2), lambda i: (0, 0)),
            pl.BlockSpec((1, d2), lambda i: (0, 0)),
            pl.BlockSpec((2, d2), lambda i: (0, 0)),
            pl.BlockSpec((2, 1), lambda i: (0, 0)),
        ],
        out_specs=pl.BlockSpec((2, TB), lambda i: (0, i)),  # lane-dense output
        compiler_params=pltpu.CompilerParams(
            dimension_semantics=("parallel",),
            vmem_limit_bytes=vmem_limit),
        cost_estimate=pl.CostEstimate(
            flops=flops, transcendentals=0, bytes_accessed=bytes_accessed),
    )(x_f32, w1, b1, w2, b2, w3t, b3t)

    return out_t.T                                        # (B, 2) f32


def init_ldiscriminator_params(key, nROI):
    """nn.Linear-style init, U[-1/sqrt(fan_in), 1/sqrt(fan_in)].

    Weights stored (in_features, out_features); biases (1, out_features).
    """
    d1 = nROI // 2
    d2 = nROI // 4
    dims = [(nROI, d1), (d1, d2), (d2, 2)]
    params = {}
    for i, (fan_in, fan_out) in enumerate(dims, start=1):
        key, kw, kb = jax.random.split(key, 3)
        bound = 1.0 / (fan_in ** 0.5)
        params[f"w{i}"] = jax.random.uniform(
            kw, (fan_in, fan_out), jnp.float32, -bound, bound)
        params[f"b{i}"] = jax.random.uniform(
            kb, (1, fan_out), jnp.float32, -bound, bound)
    return params


if __name__ == "__main__":
    key = jax.random.PRNGKey(0)
    B, nROI = 8, 32  # small shapes consistent with the module

    key, kx, kp = jax.random.split(key, 3)
    x = jax.random.normal(kx, (B, nROI), jnp.float32)
    params = init_ldiscriminator_params(kp, nROI)

    # Force the Pallas path (bypass the small-batch fast path) for the test.
    pred = ldiscriminator_forward(x, params, min_pallas_rows=0)
    pred = jax.block_until_ready(pred)
    ref = _jnp_forward(x, params)
    assert pred.shape == (B, 2)
    assert jnp.allclose(pred, ref, atol=1e-3, rtol=1e-3)

    # Second check: multi-tile grid with an overhanging (masked) last block.
    key, kx2 = jax.random.split(key)
    B2 = 260
    x2 = jax.random.normal(kx2, (B2, nROI), jnp.float32)
    pred2 = ldiscriminator_forward(x2, params, min_pallas_rows=0)
    pred2 = jax.block_until_ready(pred2)
    ref2 = _jnp_forward(x2, params)
    assert pred2.shape == (B2, 2)
    assert jnp.allclose(pred2, ref2, atol=1e-3, rtol=1e-3)

    print("KERNEL_OK")
</pallas_src>

<mosaic_0001>
module attributes {stable_mosaic.version = 11 : i64} {
  func.func @_ldisc_kernel(%arg0: i32, %arg1: memref<8x32xf32, #tpu.memory_space<vmem>>, %arg2: memref<32x16xf32, #tpu.memory_space<vmem>>, %arg3: memref<1x16xf32, #tpu.memory_space<vmem>>, %arg4: memref<16x8xf32, #tpu.memory_space<vmem>>, %arg5: memref<1x8xf32, #tpu.memory_space<vmem>>, %arg6: memref<2x8xf32, #tpu.memory_space<vmem>>, %arg7: memref<2x1xf32, #tpu.memory_space<vmem>>, %arg8: memref<2x8xf32, #tpu.memory_space<vmem>>) attributes {dimension_semantics = [#tpu.dimension_semantics<parallel>], iteration_bounds = array<i64: 1>, scalar_prefetch = 0 : i64, scratch_operands = 0 : i64, tpu.core_type = #tpu.core_type<tc>, window_params = [{transform_indices = @transform_0, window_bounds = array<i64: 8, 32>}, {pipeline_mode = #tpu.pipeline_mode<synchronous>, transform_indices = @transform_1, window_bounds = array<i64: 32, 16>}, {pipeline_mode = #tpu.pipeline_mode<synchronous>, transform_indices = @transform_2, window_bounds = array<i64: 1, 16>}, {pipeline_mode = #tpu.pipeline_mode<synchronous>, transform_indices = @transform_3, window_bounds = array<i64: 16, 8>}, {pipeline_mode = #tpu.pipeline_mode<synchronous>, transform_indices = @transform_4, window_bounds = array<i64: 1, 8>}, {pipeline_mode = #tpu.pipeline_mode<synchronous>, transform_indices = @transform_5, window_bounds = array<i64: 2, 8>}, {pipeline_mode = #tpu.pipeline_mode<synchronous>, transform_indices = @transform_6, window_bounds = array<i64: 2, 1>}, {transform_indices = @transform_7, window_bounds = array<i64: 2, 8>}]} {
    %c0 = arith.constant 0 : index
    %c0_0 = arith.constant 0 : index
    %0 = vector.load %arg1[%c0, %c0_0] : memref<8x32xf32, #tpu.memory_space<vmem>>, vector<8x32xf32>
    %c0_1 = arith.constant 0 : index
    %c0_2 = arith.constant 0 : index
    %1 = vector.load %arg2[%c0_1, %c0_2] : memref<32x16xf32, #tpu.memory_space<vmem>>, vector<32x16xf32>
    %cst = arith.constant dense<0.000000e+00> : vector<8x16xf32>
    %2 = tpu.matmul %0, %1, %cst {dimension_numbers = #tpu.dot_dimension_numbers<[1], [0], [0], [1], [0, 0, 1, 1], [], []>} : vector<8x32xf32>, vector<32x16xf32>, vector<8x16xf32> -> vector<8x16xf32>
    %c0_3 = arith.constant 0 : index
    %c0_4 = arith.constant 0 : index
    %3 = vector.load %arg3[%c0_3, %c0_4] : memref<1x16xf32, #tpu.memory_space<vmem>>, vector<1x16xf32>
    %4 = vector.broadcast %3 : vector<1x16xf32> to vector<8x16xf32>
    %5 = arith.addf %2, %4 : vector<8x16xf32>
    %cst_5 = arith.constant 2.000000e-01 : f32
    %6 = vector.broadcast %cst_5 : f32 to vector<8x16xf32>
    %7 = arith.mulf %6, %5 : vector<8x16xf32>
    %8 = arith.maximumf %5, %7 : vector<8x16xf32>
    %c0_6 = arith.constant 0 : index
    %c0_7 = arith.constant 0 : index
    %9 = vector.load %arg4[%c0_6, %c0_7] : memref<16x8xf32, #tpu.memory_space<vmem>>, vector<16x8xf32>
    %cst_8 = arith.constant dense<0.000000e+00> : vector<8x8xf32>
    %10 = tpu.matmul %8, %9, %cst_8 {dimension_numbers = #tpu.dot_dimension_numbers<[1], [0], [0], [1], [0, 0, 1, 1], [], []>} : vector<8x16xf32>, vector<16x8xf32>, vector<8x8xf32> -> vector<8x8xf32>
    %c0_9 = arith.constant 0 : index
    %c0_10 = arith.constant 0 : index
    %11 = vector.load %arg5[%c0_9, %c0_10] : memref<1x8xf32, #tpu.memory_space<vmem>>, vector<1x8xf32>
    %12 = vector.broadcast %11 : vector<1x8xf32> to vector<8x8xf32>
    %13 = arith.addf %10, %12 : vector<8x8xf32>
    %cst_11 = arith.constant 2.000000e-01 : f32
    %14 = vector.broadcast %cst_11 : f32 to vector<8x8xf32>
    %15 = arith.mulf %14, %13 : vector<8x8xf32>
    %16 = arith.maximumf %13, %15 : vector<8x8xf32>
    %c0_12 = arith.constant 0 : index
    %c0_13 = arith.constant 0 : index
    %17 = vector.load %arg6[%c0_12, %c0_13] : memref<2x8xf32, #tpu.memory_space<vmem>>, vector<2x8xf32>
    %cst_14 = arith.constant dense<0.000000e+00> : vector<2x8xf32>
    %18 = tpu.matmul %17, %16, %cst_14 {dimension_numbers = #tpu.dot_dimension_numbers<[1], [1], [0], [0], [0, 0, 1, 0], [], []>} : vector<2x8xf32>, vector<8x8xf32>, vector<2x8xf32> -> vector<2x8xf32>
    %c0_15 = arith.constant 0 : index
    %c0_16 = arith.constant 0 : index
    %19 = vector.load %arg7[%c0_15, %c0_16] : memref<2x1xf32, #tpu.memory_space<vmem>>, vector<2x1xf32>
    %20 = vector.broadcast %19 : vector<2x1xf32> to vector<2x8xf32>
    %21 = arith.addf %18, %20 : vector<2x8xf32>
    %c0_17 = arith.constant 0 : index
    %c0_18 = arith.constant 0 : index
    %22 = vector.load %arg8[%c0_17, %c0_18] : memref<2x8xf32, #tpu.memory_space<vmem>>, vector<2x8xf32>
    tpu.vector_store %arg8[%c0_17, %c0_18], %21 {strides = array<i32>} : memref<2x8xf32, #tpu.memory_space<vmem>>, vector<2x8xf32>,
    return
  }
  func.func @transform_0(%arg0: i32) -> (i32, i32) {
    %c0_i32 = arith.constant 0 : i32
    %c0_i32_0 = arith.constant 0 : i32
    return %arg0, %c0_i32 : i32, i32
  }
  func.func @transform_1(%arg0: i32) -> (i32, i32) {
    %c0_i32 = arith.constant 0 : i32
    %c0_i32_0 = arith.constant 0 : i32
    %c0_i32_1 = arith.constant 0 : i32
    return %c0_i32, %c0_i32_0 : i32, i32
  }
  func.func @transform_2(%arg0: i32) -> (i32, i32) {
    %c0_i32 = arith.constant 0 : i32
    %c0_i32_0 = arith.constant 0 : i32
    %c0_i32_1 = arith.constant 0 : i32
    return %c0_i32, %c0_i32_0 : i32, i32
  }
  func.func @transform_3(%arg0: i32) -> (i32, i32) {
    %c0_i32 = arith.constant 0 : i32
    %c0_i32_0 = arith.constant 0 : i32
    %c0_i32_1 = arith.constant 0 : i32
    return %c0_i32, %c0_i32_0 : i32, i32
  }
  func.func @transform_4(%arg0: i32) -> (i32, i32) {
    %c0_i32 = arith.constant 0 : i32
    %c0_i32_0 = arith.constant 0 : i32
    %c0_i32_1 = arith.constant 0 : i32
    return %c0_i32, %c0_i32_0 : i32, i32
  }
  func.func @transform_5(%arg0: i32) -> (i32, i32) {
    %c0_i32 = arith.constant 0 : i32
    %c0_i32_0 = arith.constant 0 : i32
    %c0_i32_1 = arith.constant 0 : i32
    return %c0_i32, %c0_i32_0 : i32, i32
  }
  func.func @transform_6(%arg0: i32) -> (i32, i32) {
    %c0_i32 = arith.constant 0 : i32
    %c0_i32_0 = arith.constant 0 : i32
    %c0_i32_1 = arith.constant 0 : i32
    return %c0_i32, %c0_i32_0 : i32, i32
  }
  func.func @transform_7(%arg0: i32) -> (i32, i32) {
    %c0_i32 = arith.constant 0 : i32
    %c0_i32_0 = arith.constant 0 : i32
    return %c0_i32, %arg0 : i32, i32
  }
}

</mosaic_0001>

<llo_original>
// kernel: tpu_custom_call.1
$region0: #{tpu_custom_call.1}
  #allocation0 [shape = 'u32[]', space=smem, size = 0x4, offset = 0x4, fixed_abs, tag = 'smem constant byte address 0x4 - core index']
  #allocation1 [shape = 'u32[144,128]{1,0:T(1,128)}', space=vmem, size = 0x12000, scoped, tag = 'internal scratch']
  %s0 = inlined_call_operand.vmem [shape: f32[8,32], index: 0, kind: input, shape index: {}]
  %s1 = inlined_call_operand.vmem [shape: f32[32,16], index: 1, kind: input, shape index: {}]
  %s2 = inlined_call_operand.vmem [shape: f32[1,16], index: 2, kind: input, shape index: {}]
  %s3 = inlined_call_operand.vmem [shape: f32[16,8], index: 3, kind: input, shape index: {}]
  %s4 = inlined_call_operand.vmem [shape: f32[1,8], index: 4, kind: input, shape index: {}]
  %s5 = inlined_call_operand.vmem [shape: f32[2,8], index: 5, kind: input, shape index: {}]
  %s6 = inlined_call_operand.vmem [shape: f32[2,1], index: 6, kind: input, shape index: {}]
  %s7 = inlined_call_operand.hbm [shape: f32[2,8], index: 7, kind: output, shape index: {}]
  %s8 = sld [smem:[#allocation0]]
  $region38: #{tpu_custom_call.1} parent=0
    _
  %s10 = ssub.s32 1, %s8
  %s11 = scalar_select 0, %s10, %s8
  $region1: #{tpu_custom_call.1} parent=0
    #allocation2 [shape = 'u8[1024]{0}', space=vmem, size = 0x400, scoped, tag = 'output window, operand 0, single buffered']
    #allocation3 [shape = 's32[1]{0}', space=sflag, size = 0x4, scoped, tag = 'scoped memory for tpu_custom_call.1']
    %12 = vsyncpa [#allocation3], 0
    // Predicated region
    $region2: #{tpu_custom_call.1} parent=1 // pred_check
      _
    $region3: #{tpu_custom_call.1} parent=1 // pred_check_branch
      %14 = sbr.rel (0) target = $region5
    $region4: #{tpu_custom_call.1} parent=1 // pred_region
      _
    $region5: #{tpu_custom_call.1} parent=1 // pred_fallthru
      _
    // Predicated region
    $region6: #{tpu_custom_call.1} parent=1 // pred_check
      _
    $region7: #{tpu_custom_call.1} parent=1 // pred_check_branch
      %16 = sbr.rel (0) target = $region9
    $region8: #{tpu_custom_call.1} parent=1 // pred_region
      _
    $region9: #{tpu_custom_call.1} parent=1 // pred_fallthru
      _
    // Predicated region
    $region10: #{tpu_custom_call.1} parent=1 // pred_check
      _
    $region11: #{tpu_custom_call.1} parent=1 // pred_check_branch
      %18 = sbr.rel (0) target = $region13
    $region12: #{tpu_custom_call.1} parent=1 // pred_region
      _
    $region13: #{tpu_custom_call.1} parent=1 // pred_fallthru
      _
    // Predicated region
    $region14: #{tpu_custom_call.1} parent=1 // pred_check
      _
    $region15: #{tpu_custom_call.1} parent=1 // pred_check_branch
      %20 = sbr.rel (0) target = $region17
    $region16: #{tpu_custom_call.1} parent=1 // pred_region
      _
    $region17: #{tpu_custom_call.1} parent=1 // pred_fallthru
      _
    // Predicated region
    $region18: #{tpu_custom_call.1} parent=1 // pred_check
      _
    $region19: #{tpu_custom_call.1} parent=1 // pred_check_branch
      %22 = sbr.rel (0) target = $region21
    $region20: #{tpu_custom_call.1} parent=1 // pred_region
      _
    $region21: #{tpu_custom_call.1} parent=1 // pred_fallthru
      _
    // Predicated region
    $region22: #{tpu_custom_call.1} parent=1 // pred_check
      _
    $region23: #{tpu_custom_call.1} parent=1 // pred_check_branch
      %24 = sbr.rel (0) target = $region25
    $region24: #{tpu_custom_call.1} parent=1 // pred_region
      _
    $region25: #{tpu_custom_call.1} parent=1 // pred_fallthru
      _
    // Predicated region
    $region26: #{tpu_custom_call.1} parent=1 // pred_check
      _
    $region27: #{tpu_custom_call.1} parent=1 // pred_check_branch
      %26 = sbr.rel (0) target = $region29
    $region28: #{tpu_custom_call.1} parent=1 // pred_region
      _
    $region29: #{tpu_custom_call.1} parent=1 // pred_fallthru
      _
    %v27 = vld [vmem:[%s0] sm:$0xff]
    %v28 = vld [vmem:[%s1] sm:$0xff]
    %v29 = vld [vmem:[%s1 + $0x8] sm:$0xff]
    %v30 = vld [vmem:[%s1 + $0x10] sm:$0xff]
    %v31 = vld [vmem:[%s1 + $0x18] sm:$0xff]
    %v32 = vld [vmem:[%s2] sm:$0x1]
    %v34 = vlaneseq
    %v35 = vshrl.u32 %v34, 7
    %v36 = vsub.s32 0, %v35
    %v37 = vrot.slane %v32, %v36
    %vm39 = vcmask 261120
    %v41 = vsel %vm39, %v27, 0
    %43 = vmatprep.subr.mxu0 0.0
    %44 = vmatpush1.msra.mxu0 %v28
    %45 = vmatprep.subr.mxu0 0.0
    %46 = vmatpush1.msra.mxu0 %v29
    %47 = vmatprep.subr.mxu0 0.0
    %48 = vmatpush1.msra.mxu0 %v30
    %49 = vmatprep.subr.mxu0 0.0
    %50 = vmatpush1.msra.mxu0 %v31
    %51 = vmatprep.subr.mxu0 0.0
    %52 = vmatpush1.msra.mxu0 0.0
    %53 = vmatprep.subr.mxu0 0.0
    %54 = vmatpush1.msra.mxu0 0.0
    %55 = vmatprep.subr.mxu0 0.0
    %56 = vmatpush1.msra.mxu0 0.0
    %57 = vmatprep.subr.mxu0 0.0
    %58 = vmatpush1.msra.mxu0 0.0
    %59 = vmatprep.subr.mxu0 0.0
    %60 = vmatpush1.msra.mxu0 0.0
    %61 = vmatprep.subr.mxu0 0.0
    %62 = vmatpush1.msra.mxu0 0.0
    %63 = vmatprep.subr.mxu0 0.0
    %64 = vmatpush1.msra.mxu0 0.0
    %65 = vmatprep.subr.mxu0 0.0
    %66 = vmatpush1.msra.mxu0 0.0
    %67 = vmatprep.subr.mxu0 0.0
    %68 = vmatpush1.msra.mxu0 0.0
    %69 = vmatprep.subr.mxu0 0.0
    %70 = vmatpush1.msra.mxu0 0.0
    %71 = vmatprep.subr.mxu0 0.0
    %72 = vmatpush1.msra.mxu0 0.0
    %73 = vmatprep.subr.mxu0 0.0
    %74 = vmatpush1.msra.mxu0 0.0
    %75 = vmatprep.subr.mxu0 0.0
    %76 = vmatpush1.msra.mxu0 0.0
    %77 = vmatprep.subr.mxu0 0.0
    %78 = vmatpush1.msra.mxu0 0.0
    %79 = vmatprep.subr.mxu0 0.0
    %80 = vmatpush1.msra.mxu0 0.0
    %81 = vmatprep.subr.mxu0 0.0
    %82 = vmatpush1.msra.mxu0 0.0
    %83 = vmatprep.subr.mxu0 0.0
    %84 = vmatpush1.msra.mxu0 0.0
    %85 = vmatprep.subr.mxu0 0.0
    %86 = vmatpush1.msra.mxu0 0.0
    %87 = vmatprep.subr.mxu0 0.0
    %88 = vmatpush1.msra.mxu0 0.0
    %89 = vmatprep.subr.mxu0 0.0
    %90 = vmatpush1.msra.mxu0 0.0
    %91 = vmatprep.subr.mxu0 0.0
    %92 = vmatpush1.msra.mxu0 0.0
    %93 = vmatprep.subr.mxu0 0.0
    %94 = vmatpush1.msra.mxu0 0.0
    %95 = vmatprep.subr.mxu0 0.0
    %96 = vmatpush1.msra.mxu0 0.0
    %97 = vmatprep.subr.mxu0 0.0
    %98 = vmatpush1.msra.mxu0 0.0
    %99 = vmatprep.subr.mxu0 0.0
    %100 = vmatpush1.msra.mxu0 0.0
    %101 = vmatprep.subr.mxu0 0.0
    %102 = vmatpush1.msra.mxu0 0.0
    %103 = vmatprep.subr.mxu0 0.0
    %104 = vmatpush1.msra.mxu0 0.0
    %105 = vmatprep.subr.mxu0 0.0
    %106 = vmatpush1.msra.mxu0 0.0
    %107 = vmatprep.mubr.f32.mxu0 0.0
    %108 = vmatmul.mubr.f32.gmra.mrb[0].mxu0 %v41
    %v109 = vpop.f32.mrb[0].mxu0
    %v110 = vadd.f32 %v37, %v109
    %v111 = vpop.f32.mrb[0].mxu0
    %112 = vdwg.mxu0
    %v113 = vmul.f32 %v110, 0.2
    %v114 = vmax.f32 %v110, %v113
    %v115 = vld [vmem:[%s3] sm:$0xff]
    %v116 = vld [vmem:[%s3 + $0x8] sm:$0xff]
    %v117 = vld [vmem:[%s4] sm:$0x1]
    %v119 = vlaneseq
    %v120 = vshrl.u32 %v119, 7
    %v121 = vsub.s32 0, %v120
    %v122 = vrot.slane %v117, %v121
    %vm124 = vcmask 130048
    %v126 = vsel %vm124, %v114, 0
    %128 = vmatprep.subr.mxu0 0.0
    %129 = vmatpush1.msra.mxu0 %v115
    %130 = vmatprep.subr.mxu0 0.0
    %131 = vmatpush1.msra.mxu0 %v116
    %132 = vmatprep.subr.mxu0 0.0
    %133 = vmatpush1.msra.mxu0 0.0
    %134 = vmatprep.subr.mxu0 0.0
    %135 = vmatpush1.msra.mxu0 0.0
    %136 = vmatprep.subr.mxu0 0.0
    %137 = vmatpush1.msra.mxu0 0.0
    %138 = vmatprep.subr.mxu0 0.0
    %139 = vmatpush1.msra.mxu0 0.0
    %140 = vmatprep.subr.mxu0 0.0
    %141 = vmatpush1.msra.mxu0 0.0
    %142 = vmatprep.subr.mxu0 0.0
    %143 = vmatpush1.msra.mxu0 0.0
    %144 = vmatprep.subr.mxu0 0.0
    %145 = vmatpush1.msra.mxu0 0.0
    %146 = vmatprep.subr.mxu0 0.0
    %147 = vmatpush1.msra.mxu0 0.0
    %148 = vmatprep.subr.mxu0 0.0
    %149 = vmatpush1.msra.mxu0 0.0
    %150 = vmatprep.subr.mxu0 0.0
    %151 = vmatpush1.msra.mxu0 0.0
    %152 = vmatprep.subr.mxu0 0.0
    %153 = vmatpush1.msra.mxu0 0.0
    %154 = vmatprep.subr.mxu0 0.0
    %155 = vmatpush1.msra.mxu0 0.0
    %156 = vmatprep.subr.mxu0 0.0
    %157 = vmatpush1.msra.mxu0 0.0
    %158 = vmatprep.subr.mxu0 0.0
    %159 = vmatpush1.msra.mxu0 0.0
    %160 = vmatprep.subr.mxu0 0.0
    %161 = vmatpush1.msra.mxu0 0.0
    %162 = vmatprep.subr.mxu0 0.0
    %163 = vmatpush1.msra.mxu0 0.0
    %164 = vmatprep.subr.mxu0 0.0
    %165 = vmatpush1.msra.mxu0 0.0
    %166 = vmatprep.subr.mxu0 0.0
    %167 = vmatpush1.msra.mxu0 0.0
    %168 = vmatprep.subr.mxu0 0.0
    %169 = vmatpush1.msra.mxu0 0.0
    %170 = vmatprep.subr.mxu0 0.0
    %171 = vmatpush1.msra.mxu0 0.0
    %172 = vmatprep.subr.mxu0 0.0
    %173 = vmatpush1.msra.mxu0 0.0
    %174 = vmatprep.subr.mxu0 0.0
    %175 = vmatpush1.msra.mxu0 0.0
    %176 = vmatprep.subr.mxu0 0.0
    %177 = vmatpush1.msra.mxu0 0.0
    %178 = vmatprep.subr.mxu0 0.0
    %179 = vmatpush1.msra.mxu0 0.0
    %180 = vmatprep.subr.mxu0 0.0
    %181 = vmatpush1.msra.mxu0 0.0
    %182 = vmatprep.subr.mxu0 0.0
    %183 = vmatpush1.msra.mxu0 0.0
    %184 = vmatprep.subr.mxu0 0.0
    %185 = vmatpush1.msra.mxu0 0.0
    %186 = vmatprep.subr.mxu0 0.0
    %187 = vmatpush1.msra.mxu0 0.0
    %188 = vmatprep.subr.mxu0 0.0
    %189 = vmatpush1.msra.mxu0 0.0
    %190 = vmatprep.subr.mxu0 0.0
    %191 = vmatpush1.msra.mxu0 0.0
    %192 = vmatprep.mubr.f32.mxu0 0.0
    %193 = vmatmul.mubr.f32.gmra.mrb[0].mxu0 %v126
    %v194 = vpop.f32.mrb[0].mxu0
    %v195 = vadd.f32 %v122, %v194
    %v196 = vpop.f32.mrb[0].mxu0
    %197 = vdwg.mxu0
    %v198 = vmul.f32 %v195, 0.2
    %v199 = vmax.f32 %v195, %v198
    %v200 = vld [vmem:[%s5] sm:$0x3]
    %v201 = vld [vmem:[%s6] sm:$0x3]
    %203 = vset.pattern.permute.xlu0 0
    %204 = vperm.xlu0 %203, %v201
    %v205 = vpop.permute.xlu0 %204
    %vm207 = vcmask 64512
    %v209 = vsel %vm207, %v200, 0
    %v212 = vsel %vm207, %v199, 0
    %214 = vmatprep.subr.mxu0 0.0
    %215 = vmatpush1.xpose.msra.mxu0 %v212
    %216 = vmatprep.subr.mxu0 0.0
    %217 = vmatpush1.xpose.msra.mxu0 0.0
    %218 = vmatprep.subr.mxu0 0.0
    %219 = vmatpush1.xpose.msra.mxu0 0.0
    %220 = vmatprep.subr.mxu0 0.0
    %221 = vmatpush1.xpose.msra.mxu0 0.0
    %222 = vmatprep.subr.mxu0 0.0
    %223 = vmatpush1.xpose.msra.mxu0 0.0
    %224 = vmatprep.subr.mxu0 0.0
    %225 = vmatpush1.xpose.msra.mxu0 0.0
    %226 = vmatprep.subr.mxu0 0.0
    %227 = vmatpush1.xpose.msra.mxu0 0.0
    %228 = vmatprep.subr.mxu0 0.0
    %229 = vmatpush1.xpose.msra.mxu0 0.0
    %230 = vmatprep.subr.mxu0 0.0
    %231 = vmatpush1.xpose.msra.mxu0 0.0
    %232 = vmatprep.subr.mxu0 0.0
    %233 = vmatpush1.xpose.msra.mxu0 0.0
    %234 = vmatprep.subr.mxu0 0.0
    %235 = vmatpush1.xpose.msra.mxu0 0.0
    %236 = vmatprep.subr.mxu0 0.0
    %237 = vmatpush1.xpose.msra.mxu0 0.0
    %238 = vmatprep.subr.mxu0 0.0
    %239 = vmatpush1.xpose.msra.mxu0 0.0
    %240 = vmatprep.subr.mxu0 0.0
    %241 = vmatpush1.xpose.msra.mxu0 0.0
    %242 = vmatprep.subr.mxu0 0.0
    %243 = vmatpush1.xpose.msra.mxu0 0.0
    %244 = vmatprep.subr.mxu0 0.0
    %245 = vmatpush1.xpose.msra.mxu0 0.0
    %246 = vmatprep.subr.mxu0 0.0
    %247 = vmatpush1.xpose.msra.mxu0 0.0
    %248 = vmatprep.subr.mxu0 0.0
    %249 = vmatpush1.xpose.msra.mxu0 0.0
    %250 = vmatprep.subr.mxu0 0.0
    %251 = vmatpush1.xpose.msra.mxu0 0.0
    %252 = vmatprep.subr.mxu0 0.0
    %253 = vmatpush1.xpose.msra.mxu0 0.0
    %254 = vmatprep.subr.mxu0 0.0
    %255 = vmatpush1.xpose.msra.mxu0 0.0
    %256 = vmatprep.subr.mxu0 0.0
    %257 = vmatpush1.xpose.msra.mxu0 0.0
    %258 = vmatprep.subr.mxu0 0.0
    %259 = vmatpush1.xpose.msra.mxu0 0.0
    %260 = vmatprep.subr.mxu0 0.0
    %261 = vmatpush1.xpose.msra.mxu0 0.0
    %262 = vmatprep.subr.mxu0 0.0
    %263 = vmatpush1.xpose.msra.mxu0 0.0
    %264 = vmatprep.subr.mxu0 0.0
    %265 = vmatpush1.xpose.msra.mxu0 0.0
    %266 = vmatprep.subr.mxu0 0.0
    %267 = vmatpush1.xpose.msra.mxu0 0.0
    %268 = vmatprep.subr.mxu0 0.0
    %269 = vmatpush1.xpose.msra.mxu0 0.0
    %270 = vmatprep.subr.mxu0 0.0
    %271 = vmatpush1.xpose.msra.mxu0 0.0
    %272 = vmatprep.subr.mxu0 0.0
    %273 = vmatpush1.xpose.msra.mxu0 0.0
    %274 = vmatprep.subr.mxu0 0.0
    %275 = vmatpush1.xpose.msra.mxu0 0.0
    %276 = vmatprep.subr.mxu0 0.0
    %277 = vmatpush1.xpose.msra.mxu0 0.0
    %278 = vmatprep.mubr.f32.mxu0 0.0
    %279 = vmatmul.mubr.f32.gmra.mrb[0].mxu0 %v209
    %v280 = vpop.f32.mrb[0].mxu0
    %v281 = vadd.f32 %v205, %v280
    %v282 = vpop.f32.mrb[0].mxu0
    %283 = vdwg.mxu0
    %vm284 = vcmask 58368
    %285 = vst.msk [vmem:[#allocation2] sm:$0x3] %vm284, %v281
    // Predicated region
    $region30: #{tpu_custom_call.1} parent=1 // pred_check
      _
    $region31: #{tpu_custom_call.1} parent=1 // pred_check_branch
      %287 = sbr.rel (0) target = $region33
    $region32: #{tpu_custom_call.1} parent=1 // pred_region
      %s289 = ssub.s32 32, 32
      %290 = vsyncadd [#allocation3], %s289
      %s292 = sshll.u32 [#allocation2], 4
      %s293 = int_to_ptr.vmem [resolvable:$true] %s292
      %295 = dma.vmem_to_hbm [thread:$0]  %s293, 32, %s7, [#allocation3]
    $region33: #{tpu_custom_call.1} parent=1 // pred_fallthru
      _
    // Predicated region
    $region34: #{tpu_custom_call.1} parent=1 // pred_check
      _
    $region35: #{tpu_custom_call.1} parent=1 // pred_check_branch
      %297 = sbr.rel (0) target = $region37
    $region36: #{tpu_custom_call.1} parent=1 // pred_region
      %298 = dma.done [#allocation3], 32
    $region37: #{tpu_custom_call.1} parent=1 // pred_fallthru
      _
    %299 = vsyncpa [#allocation3], 1

</llo_original>
